<compile_context>
chip_gen: v7x
topology: tpu7x:2x2x1
jax: 0.10.0
libtpu: 0.0.40
codegen_flags: <defaults>
</compile_context>

<pallas_src>
import jax
import jax.numpy as jnp
from jax import lax
from jax.experimental import pallas as pl
from jax.experimental.pallas import tpu as pltpu


def _make_kernel(has_pos, apply_dropout, dropout_prob, eps):
    keep_prob = 1.0 - dropout_prob
    inv_keep = 1.0 / keep_prob if keep_prob > 0.0 else 0.0

    def kernel(*refs):
        i = 0
        x_ref = refs[i]; i += 1
        pos_ref = None
        if has_pos:
            pos_ref = refs[i]; i += 1
        mask_ref = None
        if apply_dropout:
            mask_ref = refs[i]; i += 1
        gamma_ref, beta_ref, o_ref = refs[i], refs[i + 1], refs[i + 2]

        # x block: (1, tile_s, D); pos block: (tile_s, D) or (1, tile_s, D); broadcasting is fine.
        x = x_ref[...].astype(jnp.float32)
        if pos_ref is not None:
            x = x + pos_ref[...].astype(jnp.float32)

        if mask_ref is not None:
            # Inverted dropout, same semantics as nn.Dropout(p) in training mode.
            keep = mask_ref[...] >= jnp.float32(dropout_prob)
            x = jnp.where(keep, x * jnp.float32(inv_keep), jnp.float32(0.0))

        # LayerNorm over the last (embedding) dimension.
        mean = jnp.mean(x, axis=-1, keepdims=True)
        centered = x - mean
        var = jnp.mean(centered * centered, axis=-1, keepdims=True)
        y = centered * lax.rsqrt(var + jnp.float32(eps))

        # Hoisted affine params (loaded/cast once per grid step).
        gamma = gamma_ref[...].astype(jnp.float32)
        beta = beta_ref[...].astype(jnp.float32)
        o_ref[...] = (y * gamma + beta).astype(o_ref.dtype)

    return kernel


def _pick_tile_s(S, D, n_streams, max_tile_rows):
    # Keep (n_streams row-tiled arrays) x (2 pipeline buffers) under ~12 MiB so the
    # default scoped-VMEM limit is enough on every generation (v5e 16 MiB is the floor).
    budget_bytes = 12 * 1024 * 1024
    cap = budget_bytes // max(1, n_streams * 2 * D * 4)
    cap = min(cap, max_tile_rows)
    cap = max(8, (cap // 8) * 8)
    if S <= cap:
        return S  # full-extent block: always layout-legal
    for t in range(cap, 7, -8):  # multiple-of-8 divisor (sublane pack for f32)
        if S % t == 0:
            return t
    return S  # fallback: one block over the whole sequence (still correct)


def embedding_processor(input_embedding, position_embedding, gamma, beta, *,
                        dropout_prob=0.25, training=True, dropout_key=None,
                        eps=1e-5, max_tile_rows=1024):
    B, S, D = input_embedding.shape
    apply_dropout = bool(training) and float(dropout_prob) > 0.0
    has_pos = position_embedding is not None

    pos = None
    pos_is_batched = False
    if has_pos:
        pos = position_embedding
        if pos.ndim == 3 and pos.shape[0] == B and B > 1:
            pos_is_batched = True          # genuinely per-batch position embedding
        else:
            pos = jnp.reshape(pos, (S, D))  # shared across batch: never broadcast to (B,S,D)

    # Streaming (row-tiled) arrays through VMEM: x, out, (pos), (mask).
    n_streams = 2 + int(has_pos) + int(apply_dropout)
    tile_s = _pick_tile_s(S, D, n_streams, max_tile_rows)
    grid = (B, S // tile_s)

    in_specs = [pl.BlockSpec((1, tile_s, D), lambda b, s: (b, s, 0))]
    args = [input_embedding]
    if has_pos:
        if pos_is_batched:
            in_specs.append(pl.BlockSpec((1, tile_s, D), lambda b, s: (b, s, 0)))
        else:
            in_specs.append(pl.BlockSpec((tile_s, D), lambda b, s: (s, 0)))
        args.append(pos)
    if apply_dropout:
        if dropout_key is None:
            dropout_key = jax.random.PRNGKey(0)
        # Host-side uniform mask: portable (TPU + interpret), no in-kernel PRNG needed.
        mask = jax.random.uniform(dropout_key, (B, S, D), dtype=jnp.float32)
        in_specs.append(pl.BlockSpec((1, tile_s, D), lambda b, s: (b, s, 0)))
        args.append(mask)
    in_specs.append(pl.BlockSpec((1, D), lambda b, s: (0, 0)))
    in_specs.append(pl.BlockSpec((1, D), lambda b, s: (0, 0)))
    args += [gamma.reshape(1, D), beta.reshape(1, D)]

    kernel = _make_kernel(has_pos, apply_dropout, float(dropout_prob), float(eps))

    return pl.pallas_call(
        kernel,
        out_shape=jax.ShapeDtypeStruct((B, S, D), input_embedding.dtype),
        grid=grid,
        in_specs=in_specs,
        out_specs=pl.BlockSpec((1, tile_s, D), lambda b, s: (b, s, 0)),
        compiler_params=pltpu.CompilerParams(
            dimension_semantics=("parallel", "parallel")),  # independent blocks -> megacore OK
    )(*args)


if __name__ == "__main__":
    key = jax.random.PRNGKey(0)
    k1, k2, k3 = jax.random.split(key, 3)

    batch, seq, embedding_dim = 2, 8, 128
    x = jax.random.normal(k1, (batch, seq, embedding_dim), dtype=jnp.float32)
    pos = jax.random.normal(k2, (1, seq, embedding_dim), dtype=jnp.float32)

    # nn.LayerNorm(embedding_dim) default init: weight=1, bias=0 (deterministic).
    gamma = jnp.ones((embedding_dim,), dtype=jnp.float32)
    beta = jnp.zeros((embedding_dim,), dtype=jnp.float32)

    # Eval-mode path (dropout = identity): check against a pure-JAX reference.
    out_eval = embedding_processor(x, pos, gamma, beta, dropout_prob=0.25, training=False)
    jax.block_until_ready(out_eval)

    xr = x + pos
    mean = jnp.mean(xr, axis=-1, keepdims=True)
    var = jnp.mean((xr - mean) ** 2, axis=-1, keepdims=True)
    ref = (xr - mean) * lax.rsqrt(var + 1e-5) * gamma + beta
    assert jnp.allclose(out_eval, ref, atol=1e-5, rtol=1e-5), "eval-mode mismatch vs reference"

    # Training-mode path (matches nn.Module default training=True); dropout mask is drawn
    # host-side with jax.random, so the kernel itself is PRNG-free and portable.
    out_train = embedding_processor(x, pos, gamma, beta, dropout_prob=0.25,
                                    training=True, dropout_key=k3)
    jax.block_until_ready(out_train)
    assert out_train.shape == (batch, seq, embedding_dim)

    # position_embedding=None path: kernel variant with no pos input at all.
    out_nopos = embedding_processor(x, None, gamma, beta, dropout_prob=0.25, training=False)
    jax.block_until_ready(out_nopos)
    mean2 = jnp.mean(x, axis=-1, keepdims=True)
    var2 = jnp.mean((x - mean2) ** 2, axis=-1, keepdims=True)
    ref2 = (x - mean2) * lax.rsqrt(var2 + 1e-5) * gamma + beta
    assert jnp.allclose(out_nopos, ref2, atol=1e-5, rtol=1e-5), "no-pos mismatch vs reference"

    print("KERNEL_OK")
</pallas_src>

<mosaic_0001>
module attributes {stable_mosaic.version = 11 : i64} {
  func.func @kernel(%arg0: i32, %arg1: i32, %arg2: memref<1x8x128xf32, #tpu.memory_space<vmem>>, %arg3: memref<8x128xf32, #tpu.memory_space<vmem>>, %arg4: memref<1x128xf32, #tpu.memory_space<vmem>>, %arg5: memref<1x128xf32, #tpu.memory_space<vmem>>, %arg6: memref<1x8x128xf32, #tpu.memory_space<vmem>>) attributes {dimension_semantics = [#tpu.dimension_semantics<parallel>, #tpu.dimension_semantics<parallel>], iteration_bounds = array<i64: 2, 1>, scalar_prefetch = 0 : i64, scratch_operands = 0 : i64, tpu.core_type = #tpu.core_type<tc>, window_params = [{transform_indices = @transform_0, window_bounds = array<i64: 1, 8, 128>}, {transform_indices = @transform_1, window_bounds = array<i64: 8, 128>}, {pipeline_mode = #tpu.pipeline_mode<synchronous>, transform_indices = @transform_2, window_bounds = array<i64: 1, 128>}, {pipeline_mode = #tpu.pipeline_mode<synchronous>, transform_indices = @transform_3, window_bounds = array<i64: 1, 128>}, {transform_indices = @transform_4, window_bounds = array<i64: 1, 8, 128>}]} {
    %c0 = arith.constant 0 : index
    %c0_0 = arith.constant 0 : index
    %c0_1 = arith.constant 0 : index
    %0 = vector.load %arg2[%c0, %c0_0, %c0_1] : memref<1x8x128xf32, #tpu.memory_space<vmem>>, vector<1x8x128xf32>
    %c0_2 = arith.constant 0 : index
    %c0_3 = arith.constant 0 : index
    %1 = vector.load %arg3[%c0_2, %c0_3] : memref<8x128xf32, #tpu.memory_space<vmem>>, vector<8x128xf32>
    %2 = vector.shape_cast %1 : vector<8x128xf32> to vector<1x8x128xf32>
    %3 = arith.addf %0, %2 : vector<1x8x128xf32>
    %cst = arith.constant dense<0.000000e+00> : vector<1x8xf32>
    %4 = vector.multi_reduction <add>, %3, %cst [2] : vector<1x8x128xf32> to vector<1x8xf32>
    %5 = vector.shape_cast %4 : vector<1x8xf32> to vector<1x8x1xf32>
    %cst_4 = arith.constant 1.280000e+02 : f32
    %6 = vector.broadcast %cst_4 : f32 to vector<1x8x1xf32>
    %7 = arith.divf %5, %6 : vector<1x8x1xf32>
    %8 = vector.broadcast %7 : vector<1x8x1xf32> to vector<1x8x128xf32>
    %9 = arith.subf %3, %8 : vector<1x8x128xf32>
    %10 = arith.mulf %9, %9 : vector<1x8x128xf32>
    %cst_5 = arith.constant dense<0.000000e+00> : vector<1x8xf32>
    %11 = vector.multi_reduction <add>, %10, %cst_5 [2] : vector<1x8x128xf32> to vector<1x8xf32>
    %12 = vector.shape_cast %11 : vector<1x8xf32> to vector<1x8x1xf32>
    %cst_6 = arith.constant 1.280000e+02 : f32
    %13 = vector.broadcast %cst_6 : f32 to vector<1x8x1xf32>
    %14 = arith.divf %12, %13 : vector<1x8x1xf32>
    %cst_7 = arith.constant 9.99999974E-6 : f32
    %15 = vector.broadcast %cst_7 : f32 to vector<1x8x1xf32>
    %16 = arith.addf %14, %15 : vector<1x8x1xf32>
    %17 = math.rsqrt %16 : vector<1x8x1xf32>
    %18 = vector.broadcast %17 : vector<1x8x1xf32> to vector<1x8x128xf32>
    %19 = arith.mulf %9, %18 : vector<1x8x128xf32>
    %c0_8 = arith.constant 0 : index
    %c0_9 = arith.constant 0 : index
    %20 = vector.load %arg4[%c0_8, %c0_9] : memref<1x128xf32, #tpu.memory_space<vmem>>, vector<1x128xf32>
    %c0_10 = arith.constant 0 : index
    %c0_11 = arith.constant 0 : index
    %21 = vector.load %arg5[%c0_10, %c0_11] : memref<1x128xf32, #tpu.memory_space<vmem>>, vector<1x128xf32>
    %22 = vector.shape_cast %20 : vector<1x128xf32> to vector<1x1x128xf32>
    %23 = vector.broadcast %22 : vector<1x1x128xf32> to vector<1x8x128xf32>
    %24 = arith.mulf %19, %23 : vector<1x8x128xf32>
    %25 = vector.shape_cast %21 : vector<1x128xf32> to vector<1x1x128xf32>
    %26 = vector.broadcast %25 : vector<1x1x128xf32> to vector<1x8x128xf32>
    %27 = arith.addf %24, %26 : vector<1x8x128xf32>
    %c0_12 = arith.constant 0 : index
    %c0_13 = arith.constant 0 : index
    %c0_14 = arith.constant 0 : index
    %28 = vector.load %arg6[%c0_12, %c0_13, %c0_14] : memref<1x8x128xf32, #tpu.memory_space<vmem>>, vector<1x8x128xf32>
    tpu.vector_store %arg6[%c0_12, %c0_13, %c0_14], %27 {strides = array<i32>} : memref<1x8x128xf32, #tpu.memory_space<vmem>>, vector<1x8x128xf32>,
    return
  }
  func.func @transform_0(%arg0: i32, %arg1: i32) -> (i32, i32, i32) {
    %c0_i32 = arith.constant 0 : i32
    %c0_i32_0 = arith.constant 0 : i32
    return %arg0, %arg1, %c0_i32 : i32, i32, i32
  }
  func.func @transform_1(%arg0: i32, %arg1: i32) -> (i32, i32) {
    %c0_i32 = arith.constant 0 : i32
    %c0_i32_0 = arith.constant 0 : i32
    return %arg1, %c0_i32 : i32, i32
  }
  func.func @transform_2(%arg0: i32, %arg1: i32) -> (i32, i32) {
    %c0_i32 = arith.constant 0 : i32
    %c0_i32_0 = arith.constant 0 : i32
    %c0_i32_1 = arith.constant 0 : i32
    return %c0_i32, %c0_i32_0 : i32, i32
  }
  func.func @transform_3(%arg0: i32, %arg1: i32) -> (i32, i32) {
    %c0_i32 = arith.constant 0 : i32
    %c0_i32_0 = arith.constant 0 : i32
    %c0_i32_1 = arith.constant 0 : i32
    return %c0_i32, %c0_i32_0 : i32, i32
  }
  func.func @transform_4(%arg0: i32, %arg1: i32) -> (i32, i32, i32) {
    %c0_i32 = arith.constant 0 : i32
    %c0_i32_0 = arith.constant 0 : i32
    return %arg0, %arg1, %c0_i32 : i32, i32, i32
  }
}

</mosaic_0001>

<llo_original>
// kernel: tpu_custom_call.1
$region0: #{tpu_custom_call.1}
  #allocation0 [shape = 'u32[]', space=smem, size = 0x4, offset = 0x4, fixed_abs, tag = 'smem constant byte address 0x4 - core index']
  #allocation1 [shape = 'u32[144,128]{1,0:T(1,128)}', space=vmem, size = 0x12000, scoped, tag = 'internal scratch']
  %s0 = inlined_call_operand.hbm [shape: f32[2,8,128], index: 0, kind: input, shape index: {}]
  %s1 = inlined_call_operand.hbm [shape: f32[8,128], index: 1, kind: input, shape index: {}]
  %s2 = inlined_call_operand.vmem [shape: f32[1,128], index: 2, kind: input, shape index: {}]
  %s3 = inlined_call_operand.vmem [shape: f32[1,128], index: 3, kind: input, shape index: {}]
  %s4 = inlined_call_operand.hbm [shape: f32[2,8,128], index: 4, kind: output, shape index: {}]
  %s5 = sld [smem:[#allocation0]]
  $region57: #{tpu_custom_call.1} parent=0
    _
  %s7 = ssub.s32 1, %s5
  %s8 = scalar_select 0, %s7, %s5
  $region1: #{tpu_custom_call.1} parent=0
    #allocation2 [shape = 'u8[8192]{0}', space=vmem, size = 0x2000, scoped, tag = 'input window, operand 0']
    #allocation3 [shape = 's32[2]{0}', space=sflag, size = 0x8, scoped, tag = 'scoped memory for tpu_custom_call.1']
    #allocation4 [shape = 's32[2]{0}', space=sflag, size = 0x8, scoped, tag = 'scoped memory for tpu_custom_call.1']
    #allocation5 [shape = 'u8[4096]{0}', space=vmem, size = 0x1000, scoped, tag = 'input window, operand 1, single buffered']
    #allocation6 [shape = 's32[1]{0}', space=sflag, size = 0x4, scoped, tag = 'scoped memory for tpu_custom_call.1']
    #allocation7 [shape = 'u8[8192]{0}', space=vmem, size = 0x2000, scoped, tag = 'output window, operand 0']
    %9 = vsyncpa [#allocation3], 0
    %s10 = scalar_lea.sflag [#allocation3], 1
    %11 = vsyncpa %s10, 0
    %12 = vsyncpa [#allocation6], 0
    %13 = vsyncpa [#allocation4], 0
    %s14 = scalar_lea.sflag [#allocation4], 1
    %15 = vsyncpa %s14, 0
    loop: start=0, step=1, limit=4
    $region2: #{tpu_custom_call.1} parent=1 // loop_pre_header
      _
    $region3: #{tpu_custom_call.1} parent=1 // loop_header
      %s17 = sphi 0, %s21
      %p18 = scmp.ge.s32.totalorder %s17, 4
      %s24 = sphi 0, %s36
      %s25 = sphi 0, %s32
      %s26 = sphi 0, %s24
      %s27 = sphi 0, %s25
      %s28 = sphi 0, %s26
      %s29 = sphi 0, %s27
      %s41 = sphi 0, %s43
      %s44 = sphi 0, %s41
      %s45 = sphi 0, %s44
      %s61 = sphi 0, %s45
      %s67 = sphi 0, %s69
      %s70 = sphi 0, %s67
      %s71 = sphi 0, %s70
      %s87 = sphi 0, %s71
      %s91 = sphi 0, %s91
      %s93 = sphi 0, %s91
      %s94 = sphi 0, %s93
      %s108 = sphi 0, %s94
      %s112 = sphi 0, %s112
      %s114 = sphi 0, %s112
      %s115 = sphi 0, %s114
      %s129 = sphi 0, %s115
      %s137 = sphi 0, %s139
      %s140 = sphi 0, %s137
      %s141 = sphi 0, %s140
      %s157 = sphi 0, %s141
    $region4: #{tpu_custom_call.1} parent=1 // loop_header_branch
      %20 = sbr.rel (%p18) target = $region8
    $region5: #{tpu_custom_call.1} parent=1 // loop_body
      %s22 = ssub.s32 %s17, 1
      %s23 = ssub.s32 %s17, 2
      %s30 = sadd.s32 1, %s25
      %p31 = scmp.ge.s32.totalorder %s30, 1
      %s32 = scalar_select %p31, 0, %s30
      %s33 = sadd.s32 1, %s24
      %s34 = scalar_select %p31, %s33, %s24
      %p35 = scmp.ge.s32.totalorder %s34, 2
      %s36 = scalar_select %p35, 0, %s34
      %s37 = ssub.s32 %s24, %s36
      %s38 = ssub.s32 %s25, %s32
      %s39 = sor.u32 %s37, %s38
      %p40 = scmp.eq.s32.totalorder %s39, 0
      %s42 = sadd.s32 %s41, 1
      %s43 = scalar_select %p40, %s41, %s42
      %p46 = pneg %p40
      %p47 = scmp.eq.s32.totalorder %s17, 1
      %p48 = por %p46, %p47
      %p49 = scmp.ne.s32.totalorder %s41, %s44
      %p50 = scmp.eq.s32.totalorder %s17, 0
      %p51 = por %p49, %p50
      %p52 = scmp.ne.s32.totalorder %s41, %s44
      %p53 = scmp.eq.s32.totalorder %s22, 1
      %p54 = por %p52, %p53
      %p55 = scmp.ne.s32.totalorder %s44, %s45
      %p56 = scmp.eq.s32.totalorder %s22, 0
      %p57 = por %p55, %p56
      %p58 = scmp.ne.s32.totalorder %s44, %s45
      %p59 = scmp.eq.s32.totalorder %s23, 1
      %p60 = por %p58, %p59
      %p62 = scmp.ne.s32.totalorder %s45, %s61
      %p63 = scmp.eq.s32.totalorder %s23, 0
      %p64 = por %p62, %p63
      %s65 = ssub.s32 %s25, %s32
      %p66 = scmp.eq.s32.totalorder %s65, 0
      %s68 = sadd.s32 %s67, 1
      %s69 = scalar_select %p66, %s67, %s68
      %p72 = pneg %p66
      %p73 = scmp.eq.s32.totalorder %s17, 1
      %p74 = por %p72, %p73
      %p75 = scmp.ne.s32.totalorder %s67, %s70
      %p76 = scmp.eq.s32.totalorder %s17, 0
      %p77 = por %p75, %p76
      %p78 = scmp.ne.s32.totalorder %s67, %s70
      %p79 = scmp.eq.s32.totalorder %s22, 1
      %p80 = por %p78, %p79
      %p81 = scmp.ne.s32.totalorder %s70, %s71
      %p82 = scmp.eq.s32.totalorder %s22, 0
      %p83 = por %p81, %p82
      %p84 = scmp.ne.s32.totalorder %s70, %s71
      %p85 = scmp.eq.s32.totalorder %s23, 1
      %p86 = por %p84, %p85
      %p88 = scmp.ne.s32.totalorder %s71, %s87
      %p89 = scmp.eq.s32.totalorder %s23, 0
      %p90 = por %p88, %p89
      %s92 = sadd.s32 %s91, 1
      %p95 = scmp.eq.s32.totalorder %s17, 1
      %p96 = scmp.ne.s32.totalorder %s91, %s93
      %p97 = scmp.eq.s32.totalorder %s17, 0
      %p98 = por %p96, %p97
      %p99 = scmp.ne.s32.totalorder %s91, %s93
      %p100 = scmp.eq.s32.totalorder %s22, 1
      %p101 = por %p99, %p100
      %p102 = scmp.ne.s32.totalorder %s93, %s94
      %p103 = scmp.eq.s32.totalorder %s22, 0
      %p104 = por %p102, %p103
      %p105 = scmp.ne.s32.totalorder %s93, %s94
      %p106 = scmp.eq.s32.totalorder %s23, 1
      %p107 = por %p105, %p106
      %p109 = scmp.ne.s32.totalorder %s94, %s108
      %p110 = scmp.eq.s32.totalorder %s23, 0
      %p111 = por %p109, %p110
      %s113 = sadd.s32 %s112, 1
      %p116 = scmp.eq.s32.totalorder %s17, 1
      %p117 = scmp.ne.s32.totalorder %s112, %s114
      %p118 = scmp.eq.s32.totalorder %s17, 0
      %p119 = por %p117, %p118
      %p120 = scmp.ne.s32.totalorder %s112, %s114
      %p121 = scmp.eq.s32.totalorder %s22, 1
      %p122 = por %p120, %p121
      %p123 = scmp.ne.s32.totalorder %s114, %s115
      %p124 = scmp.eq.s32.totalorder %s22, 0
      %p125 = por %p123, %p124
      %p126 = scmp.ne.s32.totalorder %s114, %s115
      %p127 = scmp.eq.s32.totalorder %s23, 1
      %p128 = por %p126, %p127
      %p130 = scmp.ne.s32.totalorder %s115, %s129
      %p131 = scmp.eq.s32.totalorder %s23, 0
      %p132 = por %p130, %p131
      %s133 = ssub.s32 %s24, %s36
      %s134 = ssub.s32 %s25, %s32
      %s135 = sor.u32 %s133, %s134
      %p136 = scmp.eq.s32.totalorder %s135, 0
      %s138 = sadd.s32 %s137, 1
      %s139 = scalar_select %p136, %s137, %s138
      %p142 = pneg %p136
      %p143 = scmp.eq.s32.totalorder %s17, 1
      %p144 = por %p142, %p143
      %p145 = scmp.ne.s32.totalorder %s137, %s140
      %p146 = scmp.eq.s32.totalorder %s17, 0
      %p147 = por %p145, %p146
      %p148 = scmp.ne.s32.totalorder %s137, %s140
      %p149 = scmp.eq.s32.totalorder %s22, 1
      %p150 = por %p148, %p149
      %p151 = scmp.ne.s32.totalorder %s140, %s141
      %p152 = scmp.eq.s32.totalorder %s22, 0
      %p153 = por %p151, %p152
      %p154 = scmp.ne.s32.totalorder %s140, %s141
      %p155 = scmp.eq.s32.totalorder %s23, 1
      %p156 = por %p154, %p155
      %p158 = scmp.ne.s32.totalorder %s141, %s157
      %p159 = scmp.eq.s32.totalorder %s23, 0
      %p160 = por %p158, %p159
      %p161 = scmp.le.s32.totalorder 1, %s17
      %p162 = scmp.lt.s32.totalorder %s17, 3
      %p163 = pnand %p161, %p162
      %p164 = pneg %p163
      // Predicated region
      $region9: #{tpu_custom_call.1} parent=5 // pred_check
        _
      $region10: #{tpu_custom_call.1} parent=5 // pred_check_branch
        %166 = sbr.rel (%p163) target = $region12
      $region11: #{tpu_custom_call.1} parent=5 // pred_region
        %s167 = ssub.s32 %s17, 1
        // Predicated region
        $region13: #{tpu_custom_call.1} parent=11 // pred_check
          %p168 = pneg %p83
        $region14: #{tpu_custom_call.1} parent=11 // pred_check_branch
          %170 = sbr.rel (%p168) target = $region16
        $region15: #{tpu_custom_call.1} parent=11 // pred_region
          %s172 = ssub.s32 128, 128
          %173 = vsyncadd [#allocation6], %s172
          %s174 = smul.addr %s27, 128
          %s175 = scalar_lea.hbm %s1, %s174
          %s177 = sshll.u32 [#allocation5], 4
          %s178 = int_to_ptr.vmem [resolvable:$true] %s177
          %180 = dma.hbm_to_vmem [thread:$0]  %s175, 128, %s178, [#allocation6]
        $region16: #{tpu_custom_call.1} parent=11 // pred_fallthru
          _
        // Predicated region
        $region17: #{tpu_custom_call.1} parent=11 // pred_check
          %p181 = pneg %p104
        $region18: #{tpu_custom_call.1} parent=11 // pred_check_branch
          %183 = sbr.rel (%p181) target = $region20
        $region19: #{tpu_custom_call.1} parent=11 // pred_region
          _
        $region20: #{tpu_custom_call.1} parent=11 // pred_fallthru
          _
        // Predicated region
        $region21: #{tpu_custom_call.1} parent=11 // pred_check
          %p184 = pneg %p125
        $region22: #{tpu_custom_call.1} parent=11 // pred_check_branch
          %186 = sbr.rel (%p184) target = $region24
        $region23: #{tpu_custom_call.1} parent=11 // pred_region
          _
        $region24: #{tpu_custom_call.1} parent=11 // pred_fallthru
          _
      $region12: #{tpu_custom_call.1} parent=5 // pred_fallthru
        _
      %p187 = scmp.lt.s32.totalorder %s17, 2
      // Predicated region
      $region25: #{tpu_custom_call.1} parent=5 // pred_check
        %p188 = pneg %p187
      $region26: #{tpu_custom_call.1} parent=5 // pred_check_branch
        %190 = sbr.rel (%p188) target = $region28
      $region27: #{tpu_custom_call.1} parent=5 // pred_region
        // Predicated region
        $region29: #{tpu_custom_call.1} parent=27 // pred_check
          %p191 = pneg %p51
        $region30: #{tpu_custom_call.1} parent=27 // pred_check_branch
          %193 = sbr.rel (%p191) target = $region32
        $region31: #{tpu_custom_call.1} parent=27 // pred_region
          %s194 = sand.u32 %s41, 1
          %s195 = scalar_lea.sflag [#allocation3], %s194
          %s196 = sand.u32 %s41, 1
          %s197 = smul.addr %s196, 8
          %s198 = scalar_lea.vmem [#allocation2], %s197
          %s200 = ssub.s32 128, 128
          %201 = vsyncadd %s195, %s200
          %s202 = sadd.s32 %s25, %s24
          %s203 = smul.addr %s202, 128
          %s204 = scalar_lea.hbm %s0, %s203
          %s206 = sshll.u32 %s198, 4
          %s207 = int_to_ptr.vmem [resolvable:$true] %s206
          %209 = dma.hbm_to_vmem [thread:$0]  %s204, 128, %s207, %s195
        $region32: #{tpu_custom_call.1} parent=27 // pred_fallthru
          _
      $region28: #{tpu_custom_call.1} parent=5 // pred_fallthru
        _
      %p210 = scmp.le.s32.totalorder 1, %s17
      %p211 = scmp.lt.s32.totalorder %s17, 3
      %p212 = pnand %p210, %p211
      %p213 = pneg %p212
      // Predicated region
      $region33: #{tpu_custom_call.1} parent=5 // pred_check
        _
      $region34: #{tpu_custom_call.1} parent=5 // pred_check_branch
        %215 = sbr.rel (%p212) target = $region36
      $region35: #{tpu_custom_call.1} parent=5 // pred_region
        %s216 = ssub.s32 %s17, 1
        %s217 = sand.u32 %s44, 1
        %s218 = scalar_lea.sflag [#allocation3], %s217
        %s219 = sand.u32 %s44, 1
        %s220 = smul.addr %s219, 8
        %s221 = scalar_lea.vmem [#allocation2], %s220
        // Predicated region
        $region37: #{tpu_custom_call.1} parent=35 // pred_check
          %p222 = pneg %p57
        $region38: #{tpu_custom_call.1} parent=35 // pred_check_branch
          %224 = sbr.rel (%p222) target = $region40
        $region39: #{tpu_custom_call.1} parent=35 // pred_region
          %225 = dma.done %s218, 128
        $region40: #{tpu_custom_call.1} parent=35 // pred_fallthru
          _
        // Predicated region
        $region41: #{tpu_custom_call.1} parent=35 // pred_check
          %p226 = pneg %p83
        $region42: #{tpu_custom_call.1} parent=35 // pred_check_branch
          %228 = sbr.rel (%p226) target = $region44
        $region43: #{tpu_custom_call.1} parent=35 // pred_region
          %229 = dma.done [#allocation6], 128
        $region44: #{tpu_custom_call.1} parent=35 // pred_fallthru
          _
        %s230 = sand.u32 %s44, 1
        %s231 = scalar_lea.sflag [#allocation3], %s230
        %s232 = sand.u32 %s44, 1
        %s233 = smul.addr %s232, 8
        %s234 = scalar_lea.vmem [#allocation2], %s233
        %p235 = pneg %p57
        %p236 = pneg %p54
        %p237 = pneg %p83
        %p238 = pneg %p80
        %p239 = pneg %p104
        %p240 = pneg %p101
        %p241 = pneg %p125
        %p242 = pneg %p122
        %p243 = pneg %p153
        %p244 = pneg %p150
        %s245 = sand.u32 %s140, 1
        %s246 = scalar_lea.sflag [#allocation4], %s245
        %s247 = sand.u32 %s140, 1
        %s248 = smul.addr %s247, 8
        %s249 = scalar_lea.vmem [#allocation7], %s248
        %v250 = vld [vmem:[%s221] sm:$0xff]
        %v251 = vld [vmem:[#allocation5] sm:$0xff]
        %v252 = vadd.f32 %v250, %v251
        %253 = vadd.xlane.f32.xlu0 %v252
        %v254 = vpop.xlane.xlu0 %253
        %v255 = vrcp.pop 128.0
        %v256 = vmul.f32 %v254, %v255
        %v257 = vsub.f32 %v252, %v256
        %v258 = vmul.f32 %v257, %v257
        %259 = vadd.xlane.f32.xlu0 %v258
        %v260 = vpop.xlane.xlu0 %259
        %v261 = vmul.f32 %v260, %v255
        %v262 = vadd.f32 %v261, 1e-05
        %v263 = vrsqrt.pop %v262
        %v264 = vmul.f32 %v257, %v263
        %v265 = vld [vmem:[%s2] sm:$0x1]
        %v266 = vld [vmem:[%s3] sm:$0x1]
        %v268 = vlaneseq
        %v269 = vshrl.u32 %v268, 7
        %v270 = vsub.s32 0, %v269
        %v271 = vrot.slane %v265, %v270
        %v273 = vmul.f32 %v264, %v271
        %v275 = vlaneseq
        %v276 = vshrl.u32 %v275, 7
        %v277 = vsub.s32 0, %v276
        %v278 = vrot.slane %v266, %v277
        %v280 = vadd.f32 %v273, %v278
        %281 = vst [vmem:[%s249] sm:$0xff] %v280
        %s282 = sand.u32 %s140, 1
        %s283 = scalar_lea.sflag [#allocation4], %s282
        %s284 = sand.u32 %s140, 1
        %s285 = smul.addr %s284, 8
        %s286 = scalar_lea.vmem [#allocation7], %s285
        // Predicated region
        $region45: #{tpu_custom_call.1} parent=35 // pred_check
          %p287 = pneg %p150
        $region46: #{tpu_custom_call.1} parent=35 // pred_check_branch
          %289 = sbr.rel (%p287) target = $region48
        $region47: #{tpu_custom_call.1} parent=35 // pred_region
          %s291 = ssub.s32 128, 128
          %292 = vsyncadd %s283, %s291
          %s293 = sadd.s32 %s27, %s26
          %s294 = smul.addr %s293, 128
          %s295 = scalar_lea.hbm %s4, %s294
          %s297 = sshll.u32 %s286, 4
          %s298 = int_to_ptr.vmem [resolvable:$true] %s297
          %300 = dma.vmem_to_hbm [thread:$0]  %s298, 128, %s295, %s283
        $region48: #{tpu_custom_call.1} parent=35 // pred_fallthru
          _
      $region36: #{tpu_custom_call.1} parent=5 // pred_fallthru
        _
      %p301 = scmp.le.s32.totalorder 2, %s17
      // Predicated region
      $region49: #{tpu_custom_call.1} parent=5 // pred_check
        %p302 = pneg %p301
      $region50: #{tpu_custom_call.1} parent=5 // pred_check_branch
        %304 = sbr.rel (%p302) target = $region52
      $region51: #{tpu_custom_call.1} parent=5 // pred_region
        %s305 = ssub.s32 %s17, 2
        // Predicated region
        $region53: #{tpu_custom_call.1} parent=51 // pred_check
          %p306 = pneg %p156
        $region54: #{tpu_custom_call.1} parent=51 // pred_check_branch
          %308 = sbr.rel (%p306) target = $region56
        $region55: #{tpu_custom_call.1} parent=51 // pred_region
          %s309 = sand.u32 %s141, 1
          %s310 = scalar_lea.sflag [#allocation4], %s309
          %s311 = sand.u32 %s141, 1
          %s312 = smul.addr %s311, 8
          %s313 = scalar_lea.vmem [#allocation7], %s312
          %314 = dma.done %s310, 128
        $region56: #{tpu_custom_call.1} parent=51 // pred_fallthru
          _
      $region52: #{tpu_custom_call.1} parent=5 // pred_fallthru
        _
    $region6: #{tpu_custom_call.1} parent=1 // loop_footer
      %s21 = sadd.s32 1, %s17
    $region7: #{tpu_custom_call.1} parent=1 // loop_footer_branch
      %16 = sbr.rel target = $region3
    $region8: #{tpu_custom_call.1} parent=1 // loop_exit
      _
    %315 = vsyncpa [#allocation3], 1
    %s316 = scalar_lea.sflag [#allocation3], 1
    %317 = vsyncpa %s316, 1
    %318 = vsyncpa [#allocation6], 1
    %319 = vsyncpa [#allocation4], 1
    %s320 = scalar_lea.sflag [#allocation4], 1
    %321 = vsyncpa %s320, 1

</llo_original>
